<compile_context>
chip_gen: v5e
topology: v5e:2x2
jax: 0.10.0
libtpu: 0.0.40
codegen_flags: <defaults>
</compile_context>

<pallas_src>
import math
import functools

import jax
import jax.numpy as jnp
import numpy as np
from jax.experimental import pallas as pl
from jax.experimental.pallas import tpu as pltpu


# --- bounded-range sine constants (Cody-Waite split of pi + odd Taylor) -----
_PI_HI = 3.140625                      # 8 significant bits -> k*_PI_HI exact
_PI_LO = math.pi - 3.140625
_INV_PI = 1.0 / math.pi
_S3 = -1.0 / 6.0
_S5 = 1.0 / 120.0
_S7 = -1.0 / 5040.0
_S9 = 1.0 / 362880.0
_S11 = -1.0 / 39916800.0               # degree-11: |err| < 6e-8 on [-pi/2, pi/2]


def _int_pow(x, n):
    """x ** n for static integer n >= 1 via exponentiation by squaring."""
    result = None
    base = x
    while n > 0:
        if n & 1:
            result = base if result is None else result * base
        n >>= 1
        if n > 0:
            base = base * base
    return result


def _radial_basis_kernel(d_ref, wd_ref, warg_ref, out_ref, *,
                         cutoff, p, c0, ca, cb, cc):
    # d_ref:    (T, G)    float32  raw distances, G edges packed per row
    # wd_ref:   (G, 128)  float32  expansion weights * inv_cutoff
    # warg_ref: (G, 128)  float32  expansion weights * inv_cutoff * freq
    # out_ref:  (T, 128)  float32  lane-dense output slab

    # Clamp raw distances at the cutoff.  Outputs for d >= cutoff are zeroed by
    # the envelope's where() (as in the reference), and the clamp bounds the
    # sin argument so the cheap 2-constant range reduction stays accurate.
    # This is a (T, G) op -> 1/(128/G) the width of a full-lane VPU op.
    d_c = jnp.minimum(d_ref[...], cutoff)

    # Expand to the lane-dense layout on the (otherwise idle) MXU, with the
    # per-edge scaling folded into the weights.  HIGHEST precision keeps each
    # product (single nonzero per column) accurate to ~1 f32 ulp.
    d_s = jnp.dot(d_c, wd_ref[...], preferred_element_type=jnp.float32,
                  precision=jax.lax.Precision.HIGHEST)        # d_scaled
    arg = jnp.dot(d_c, warg_ref[...], preferred_element_type=jnp.float32,
                  precision=jax.lax.Precision.HIGHEST)        # freq * d_scaled

    # --- PolynomialEnvelope(exponent=p), with norm_const folded into the
    # coefficients:  env' = c0 + d^p * (ca + d*(cb + cc*d))
    d_p = _int_pow(d_s, p)                # exponentiation by squaring (3 mults for p=5)
    env = c0 + d_p * (ca + d_s * (cb + cc * d_s))
    env = jnp.where(d_s < 1.0, env, jnp.zeros_like(env))

    # --- 1 / d_scaled on the EUP (approx) + one Newton-Raphson refinement.
    # d == 0 still yields inf -> NaN in the final product (PyTorch semantics).
    r0 = pl.reciprocal(d_s, approx=True)
    recip = r0 * (2.0 - d_s * r0)
    scale = env * recip                   # env' already carries norm_const

    # --- bounded-argument sin(arg), |arg| <= max|freq| (d clamped above) ----
    k = jnp.floor(arg * _INV_PI + 0.5)    # nearest multiple of pi
    r = arg - k * _PI_HI
    r = r - k * _PI_LO                    # r in ~[-pi/2, pi/2]
    r2 = r * r
    poly = _S11
    poly = poly * r2 + _S9
    poly = poly * r2 + _S7
    poly = poly * r2 + _S5
    poly = poly * r2 + _S3
    sin_r = r + (r * r2) * poly
    # parity sign: sin(arg) = (-1)^k * sin(r)
    half = k * 0.5
    odd = half - jnp.floor(half)          # 0.0 (even k) or 0.5 (odd k)
    sin_val = jnp.where(odd > 0.25, -sin_r, sin_r)

    out_ref[...] = scale * sin_val


def _round_up(x, m):
    return -(-x // m) * m


def radial_basis(d, frequencies, *, cutoff, exponent=5, tile_rows=2048):
    """d: (N,) float32 distances. frequencies: (num_radial,) float32.
    Returns (N, num_radial) float32, matching RadialBasis.forward semantics
    for rbf='spherical_bessel', envelope='polynomial'."""
    n = d.shape[0]
    num_radial = frequencies.shape[0]
    assert 128 % num_radial == 0, (
        "lane-dense packing requires num_radial to divide 128")
    # TODO(synk): add a plain (tile_n, num_radial) fallback path for num_radial
    #             values that do not divide 128.
    g = 128 // num_radial

    p = int(exponent)
    assert p == exponent and p > 0, "envelope exponent must be a positive integer"

    inv_cutoff = 1.0 / cutoff
    norm_const = math.sqrt(2.0 / cutoff ** 3)
    a = -(p + 1.0) * (p + 2.0) / 2.0
    b = p * (p + 2.0)
    c = -p * (p + 1.0) / 2.0
    # fold norm_const into the envelope polynomial coefficients
    c0 = norm_const
    ca = norm_const * a
    cb = norm_const * b
    cc = norm_const * c

    # --- pad N so the lane-dense (rows, 128) view tiles evenly ---------------
    # Padding distance = cutoff -> d_scaled == 1 -> envelope == 0, so padded
    # entries are (numerically) zero and never hit the 1/d singularity.
    n_rows = -(-n // g)
    max_rows = _round_up(max(n_rows, 1), 8)
    tr = min(_round_up(int(tile_rows), 8), max_rows)
    # Prefer >= 2 grid steps so the "parallel" axis can shard across both
    # TensorCores on v7x (a single-step grid leaves half the chip idle).
    if _round_up(n_rows, tr) // tr < 2 and max_rows >= 16:
        tr = _round_up(-(-max_rows // 2), 8)
    n_rows_pad = _round_up(n_rows, tr)
    n_pad = n_rows_pad * g

    d_pad = jnp.full((n_pad,), cutoff, dtype=jnp.float32)
    d_pad = d_pad.at[:n].set(d.astype(jnp.float32))
    d2 = d_pad.reshape(n_rows_pad, g)                                    # (rows, G)

    # Expansion weights with the per-edge constants folded in:
    #   eye_g[g, j] = 1 if j // num_radial == g
    eye_g = jnp.repeat(jnp.eye(g, dtype=jnp.float32), num_radial, axis=1)  # (G, 128)
    wd = eye_g * inv_cutoff
    freq_tiled = jnp.tile(frequencies.astype(jnp.float32), g)              # (128,)
    warg = eye_g * (freq_tiled * inv_cutoff)[None, :]

    kernel = functools.partial(
        _radial_basis_kernel,
        cutoff=float(cutoff), p=p,
        c0=float(c0), ca=float(ca), cb=float(cb), cc=float(cc),
    )

    out = pl.pallas_call(
        kernel,
        out_shape=jax.ShapeDtypeStruct((n_rows_pad, 128), jnp.float32),
        grid_spec=pltpu.PrefetchScalarGridSpec(
            num_scalar_prefetch=0,
            grid=(n_rows_pad // tr,),
            in_specs=[
                pl.BlockSpec((tr, g), lambda i: (i, 0)),
                pl.BlockSpec((g, 128), lambda i: (0, 0)),
                pl.BlockSpec((g, 128), lambda i: (0, 0)),
            ],
            out_specs=pl.BlockSpec((tr, 128), lambda i: (i, 0)),
        ),
        compiler_params=pltpu.CompilerParams(
            dimension_semantics=("parallel",),
            vmem_limit_bytes=32 * 1024 * 1024,
        ),
    )(d2, wd, warg)

    # Free row-major reinterpretation back to the module's (N, num_radial) view.
    return out.reshape(n_rows_pad * g, num_radial)[:n]


def radial_basis_reference(d, frequencies, *, cutoff, exponent=5):
    """Pure-JAX reference mirroring the PyTorch forward exactly."""
    p = float(exponent)
    a = -(p + 1.0) * (p + 2.0) / 2.0
    b = p * (p + 2.0)
    c = -p * (p + 1.0) / 2.0
    inv_cutoff = 1.0 / cutoff
    norm_const = math.sqrt(2.0 / cutoff ** 3)

    d_scaled = d * inv_cutoff
    env = 1.0 + a * d_scaled ** p + b * d_scaled ** (p + 1) + c * d_scaled ** (p + 2)
    env = jnp.where(d_scaled < 1.0, env, jnp.zeros_like(d_scaled))
    rbf = norm_const / d_scaled[:, None] * jnp.sin(frequencies[None, :] * d_scaled[:, None])
    return env[:, None] * rbf


if __name__ == "__main__":
    num_radial = 16
    cutoff = 5.0
    n_edges = 1000  # deliberately not a multiple of 8 -> exercises padding path

    # Deterministic parameter init (matches nn.Parameter init in __init__):
    # frequencies = pi * arange(1, num_radial + 1)
    frequencies = jnp.asarray(
        np.pi * np.arange(1, num_radial + 1, dtype=np.float32)
    )

    key = jax.random.PRNGKey(0)
    # positive distances, some beyond the cutoff to exercise the envelope's where()
    d = jax.random.uniform(
        key, (n_edges,), dtype=jnp.float32, minval=0.1, maxval=cutoff * 1.2
    )

    out = radial_basis(d, frequencies, cutoff=cutoff, exponent=5)
    out = jax.block_until_ready(out)
    assert out.shape == (n_edges, num_radial)

    ref = radial_basis_reference(d, frequencies, cutoff=cutoff, exponent=5)
    # atol accounts for the ~1-2 ulp argument-rounding difference introduced by
    # folding inv_cutoff*freq into the (HIGHEST-precision) MXU expansion weights
    # and the bounded-range sine (<6e-8 poly error); both are far inside this.
    np.testing.assert_allclose(np.asarray(out), np.asarray(ref), rtol=1e-5, atol=5e-6)

    print("KERNEL_OK")
</pallas_src>

<mosaic_0001>
module attributes {stable_mosaic.version = 11 : i64} {
  func.func @_radial_basis_kernel(%arg0: i32, %arg1: memref<64x8xf32, #tpu.memory_space<vmem>>, %arg2: memref<8x128xf32, #tpu.memory_space<vmem>>, %arg3: memref<8x128xf32, #tpu.memory_space<vmem>>, %arg4: memref<64x128xf32, #tpu.memory_space<vmem>>) attributes {dimension_semantics = [#tpu.dimension_semantics<parallel>], iteration_bounds = array<i64: 2>, scalar_prefetch = 0 : i64, scratch_operands = 0 : i64, tpu.core_type = #tpu.core_type<tc>, window_params = [{transform_indices = @transform_0, window_bounds = array<i64: 64, 8>}, {pipeline_mode = #tpu.pipeline_mode<synchronous>, transform_indices = @transform_1, window_bounds = array<i64: 8, 128>}, {pipeline_mode = #tpu.pipeline_mode<synchronous>, transform_indices = @transform_2, window_bounds = array<i64: 8, 128>}, {transform_indices = @transform_3, window_bounds = array<i64: 64, 128>}]} {
    %c0 = arith.constant 0 : index
    %c0_0 = arith.constant 0 : index
    %0 = vector.load %arg1[%c0, %c0_0] : memref<64x8xf32, #tpu.memory_space<vmem>>, vector<64x8xf32>
    %cst = arith.constant 5.000000e+00 : f32
    %1 = vector.broadcast %cst : f32 to vector<64x8xf32>
    %2 = arith.minimumf %0, %1 : vector<64x8xf32>
    %c0_1 = arith.constant 0 : index
    %c0_2 = arith.constant 0 : index
    %3 = vector.load %arg2[%c0_1, %c0_2] : memref<8x128xf32, #tpu.memory_space<vmem>>, vector<8x128xf32>
    %cst_3 = arith.constant dense<0.000000e+00> : vector<64x128xf32>
    %4 = tpu.matmul %2, %3, %cst_3 {dimension_numbers = #tpu.dot_dimension_numbers<[1], [0], [0], [1], [0, 0, 1, 1], [], []>, precision = #tpu.contract_precision<fp32>} : vector<64x8xf32>, vector<8x128xf32>, vector<64x128xf32> -> vector<64x128xf32>
    %c0_4 = arith.constant 0 : index
    %c0_5 = arith.constant 0 : index
    %5 = vector.load %arg3[%c0_4, %c0_5] : memref<8x128xf32, #tpu.memory_space<vmem>>, vector<8x128xf32>
    %cst_6 = arith.constant dense<0.000000e+00> : vector<64x128xf32>
    %6 = tpu.matmul %2, %5, %cst_6 {dimension_numbers = #tpu.dot_dimension_numbers<[1], [0], [0], [1], [0, 0, 1, 1], [], []>, precision = #tpu.contract_precision<fp32>} : vector<64x8xf32>, vector<8x128xf32>, vector<64x128xf32> -> vector<64x128xf32>
    %7 = arith.mulf %4, %4 : vector<64x128xf32>
    %8 = arith.mulf %7, %7 : vector<64x128xf32>
    %9 = arith.mulf %4, %8 : vector<64x128xf32>
    %cst_7 = arith.constant -1.89736664 : f32
    %10 = vector.broadcast %cst_7 : f32 to vector<64x128xf32>
    %11 = arith.mulf %10, %4 : vector<64x128xf32>
    %cst_8 = arith.constant 4.42718887 : f32
    %12 = vector.broadcast %cst_8 : f32 to vector<64x128xf32>
    %13 = arith.addf %12, %11 : vector<64x128xf32>
    %14 = arith.mulf %4, %13 : vector<64x128xf32>
    %cst_9 = arith.constant -2.65631318 : f32
    %15 = vector.broadcast %cst_9 : f32 to vector<64x128xf32>
    %16 = arith.addf %15, %14 : vector<64x128xf32>
    %17 = arith.mulf %9, %16 : vector<64x128xf32>
    %cst_10 = arith.constant 0.1264911 : f32
    %18 = vector.broadcast %cst_10 : f32 to vector<64x128xf32>
    %19 = arith.addf %18, %17 : vector<64x128xf32>
    %cst_11 = arith.constant 1.000000e+00 : f32
    %20 = vector.broadcast %cst_11 : f32 to vector<64x128xf32>
    %21 = arith.cmpf olt, %4, %20 : vector<64x128xf32>
    %cst_12 = arith.constant 0.000000e+00 : f32
    %22 = vector.broadcast %cst_12 : f32 to vector<64x128xf32>
    %23 = arith.select %21, %19, %22 : vector<64x128xi1>, vector<64x128xf32>
    %24 = tpu.reciprocal %4 {approx = true} : vector<64x128xf32> -> vector<64x128xf32>
    %25 = arith.mulf %4, %24 : vector<64x128xf32>
    %cst_13 = arith.constant 2.000000e+00 : f32
    %26 = vector.broadcast %cst_13 : f32 to vector<64x128xf32>
    %27 = arith.subf %26, %25 : vector<64x128xf32>
    %28 = arith.mulf %24, %27 : vector<64x128xf32>
    %29 = arith.mulf %23, %28 : vector<64x128xf32>
    %cst_14 = arith.constant 0.318309873 : f32
    %30 = vector.broadcast %cst_14 : f32 to vector<64x128xf32>
    %31 = arith.mulf %6, %30 : vector<64x128xf32>
    %cst_15 = arith.constant 5.000000e-01 : f32
    %32 = vector.broadcast %cst_15 : f32 to vector<64x128xf32>
    %33 = arith.addf %31, %32 : vector<64x128xf32>
    %34 = math.floor %33 : vector<64x128xf32>
    %cst_16 = arith.constant 3.140625 : f32
    %35 = vector.broadcast %cst_16 : f32 to vector<64x128xf32>
    %36 = arith.mulf %34, %35 : vector<64x128xf32>
    %37 = arith.subf %6, %36 : vector<64x128xf32>
    %cst_17 = arith.constant 9.67653584E-4 : f32
    %38 = vector.broadcast %cst_17 : f32 to vector<64x128xf32>
    %39 = arith.mulf %34, %38 : vector<64x128xf32>
    %40 = arith.subf %37, %39 : vector<64x128xf32>
    %41 = arith.mulf %40, %40 : vector<64x128xf32>
    %cst_18 = arith.constant -2.50521079E-8 : f32
    %42 = vector.broadcast %cst_18 : f32 to vector<64x128xf32>
    %43 = arith.mulf %42, %41 : vector<64x128xf32>
    %cst_19 = arith.constant 2.75573188E-6 : f32
    %44 = vector.broadcast %cst_19 : f32 to vector<64x128xf32>
    %45 = arith.addf %43, %44 : vector<64x128xf32>
    %46 = arith.mulf %45, %41 : vector<64x128xf32>
    %cst_20 = arith.constant -1.98412701E-4 : f32
    %47 = vector.broadcast %cst_20 : f32 to vector<64x128xf32>
    %48 = arith.addf %46, %47 : vector<64x128xf32>
    %49 = arith.mulf %48, %41 : vector<64x128xf32>
    %cst_21 = arith.constant 0.00833333377 : f32
    %50 = vector.broadcast %cst_21 : f32 to vector<64x128xf32>
    %51 = arith.addf %49, %50 : vector<64x128xf32>
    %52 = arith.mulf %51, %41 : vector<64x128xf32>
    %cst_22 = arith.constant -0.166666672 : f32
    %53 = vector.broadcast %cst_22 : f32 to vector<64x128xf32>
    %54 = arith.addf %52, %53 : vector<64x128xf32>
    %55 = arith.mulf %40, %41 : vector<64x128xf32>
    %56 = arith.mulf %55, %54 : vector<64x128xf32>
    %57 = arith.addf %40, %56 : vector<64x128xf32>
    %cst_23 = arith.constant 5.000000e-01 : f32
    %58 = vector.broadcast %cst_23 : f32 to vector<64x128xf32>
    %59 = arith.mulf %34, %58 : vector<64x128xf32>
    %60 = math.floor %59 : vector<64x128xf32>
    %61 = arith.subf %59, %60 : vector<64x128xf32>
    %cst_24 = arith.constant 2.500000e-01 : f32
    %62 = vector.broadcast %cst_24 : f32 to vector<64x128xf32>
    %63 = arith.cmpf ogt, %61, %62 : vector<64x128xf32>
    %cst_25 = arith.constant 0.000000e+00 : f32
    %64 = vector.broadcast %cst_25 : f32 to vector<64x128xf32>
    %65 = arith.subf %64, %57 : vector<64x128xf32>
    %66 = arith.select %63, %65, %57 : vector<64x128xi1>, vector<64x128xf32>
    %67 = arith.mulf %29, %66 : vector<64x128xf32>
    %c0_26 = arith.constant 0 : index
    %c0_27 = arith.constant 0 : index
    %68 = vector.load %arg4[%c0_26, %c0_27] : memref<64x128xf32, #tpu.memory_space<vmem>>, vector<64x128xf32>
    tpu.vector_store %arg4[%c0_26, %c0_27], %67 {strides = array<i32>} : memref<64x128xf32, #tpu.memory_space<vmem>>, vector<64x128xf32>,
    return
  }
  func.func @transform_0(%arg0: i32) -> (i32, i32) {
    %c0_i32 = arith.constant 0 : i32
    %c0_i32_0 = arith.constant 0 : i32
    return %arg0, %c0_i32 : i32, i32
  }
  func.func @transform_1(%arg0: i32) -> (i32, i32) {
    %c0_i32 = arith.constant 0 : i32
    %c0_i32_0 = arith.constant 0 : i32
    %c0_i32_1 = arith.constant 0 : i32
    return %c0_i32, %c0_i32_0 : i32, i32
  }
  func.func @transform_2(%arg0: i32) -> (i32, i32) {
    %c0_i32 = arith.constant 0 : i32
    %c0_i32_0 = arith.constant 0 : i32
    %c0_i32_1 = arith.constant 0 : i32
    return %c0_i32, %c0_i32_0 : i32, i32
  }
  func.func @transform_3(%arg0: i32) -> (i32, i32) {
    %c0_i32 = arith.constant 0 : i32
    %c0_i32_0 = arith.constant 0 : i32
    return %arg0, %c0_i32 : i32, i32
  }
}

</mosaic_0001>

<llo_original>
// kernel: tpu_custom_call.1
$region0: #{tpu_custom_call.1}
  #allocation0 [shape = 'u32[]', space=smem, size = 0x4, offset = 0x4, fixed_abs, tag = 'smem constant byte address 0x4 - core index']
  #allocation1 [shape = 'u32[72,128]{1,0:T(1,128)}', space=vmem, size = 0x9000, scoped, tag = 'internal scratch']
  %s0 = inlined_call_operand.vmem [shape: f32[128,8], index: 0, kind: input, shape index: {}]
  %s1 = inlined_call_operand.vmem [shape: f32[8,128], index: 1, kind: input, shape index: {}]
  %s2 = inlined_call_operand.vmem [shape: f32[8,128], index: 2, kind: input, shape index: {}]
  %s3 = inlined_call_operand.hbm [shape: f32[128,128], index: 3, kind: output, shape index: {}]
  %s4 = sld [smem:[#allocation0]]
  $region45: #{tpu_custom_call.1} parent=0
    _
  %s6 = ssub.s32 1, %s4
  %s7 = scalar_select 0, %s6, %s4
  $region1: #{tpu_custom_call.1} parent=0
    #allocation2 [shape = 'u8[65536]{0}', space=vmem, size = 0x10000, scoped, tag = 'output window, operand 0']
    #allocation3 [shape = 's32[2]{0}', space=sflag, size = 0x8, scoped, tag = 'scoped memory for tpu_custom_call.1']
    %8 = vsyncpa [#allocation3], 0
    %s9 = scalar_lea.sflag [#allocation3], 1
    %10 = vsyncpa %s9, 0
    loop: start=0, step=1, limit=4
    $region2: #{tpu_custom_call.1} parent=1 // loop_pre_header
      _
    $region3: #{tpu_custom_call.1} parent=1 // loop_header
      %s12 = sphi 0, %s16
      %p13 = scmp.ge.s32.totalorder %s12, 4
      %s22 = sphi 0, %s24
      %s25 = sphi 0, %s22
      %s26 = sphi 0, %s25
      %s42 = sphi 0, %s26
      %s46 = sphi 0, %s46
      %s48 = sphi 0, %s46
      %s49 = sphi 0, %s48
      %s63 = sphi 0, %s49
      %s67 = sphi 0, %s67
      %s69 = sphi 0, %s67
      %s70 = sphi 0, %s69
      %s84 = sphi 0, %s70
      %s90 = sphi 0, %s92
      %s93 = sphi 0, %s90
      %s94 = sphi 0, %s93
      %s110 = sphi 0, %s94
    $region4: #{tpu_custom_call.1} parent=1 // loop_header_branch
      %15 = sbr.rel (%p13) target = $region8
    $region5: #{tpu_custom_call.1} parent=1 // loop_body
      %s17 = ssub.s32 %s12, 1
      %s18 = ssub.s32 %s12, 2
      %s19 = sadd.s32 %s12, 1
      %s20 = ssub.s32 %s12, %s19
      %p21 = scmp.eq.s32.totalorder %s20, 0
      %s23 = sadd.s32 %s22, 1
      %s24 = scalar_select %p21, %s22, %s23
      %p27 = pneg %p21
      %p28 = scmp.eq.s32.totalorder %s12, 1
      %p29 = por %p27, %p28
      %p30 = scmp.ne.s32.totalorder %s22, %s25
      %p31 = scmp.eq.s32.totalorder %s12, 0
      %p32 = por %p30, %p31
      %p33 = scmp.ne.s32.totalorder %s22, %s25
      %p34 = scmp.eq.s32.totalorder %s17, 1
      %p35 = por %p33, %p34
      %p36 = scmp.ne.s32.totalorder %s25, %s26
      %p37 = scmp.eq.s32.totalorder %s17, 0
      %p38 = por %p36, %p37
      %p39 = scmp.ne.s32.totalorder %s25, %s26
      %p40 = scmp.eq.s32.totalorder %s18, 1
      %p41 = por %p39, %p40
      %p43 = scmp.ne.s32.totalorder %s26, %s42
      %p44 = scmp.eq.s32.totalorder %s18, 0
      %p45 = por %p43, %p44
      %s47 = sadd.s32 %s46, 1
      %p50 = scmp.eq.s32.totalorder %s12, 1
      %p51 = scmp.ne.s32.totalorder %s46, %s48
      %p52 = scmp.eq.s32.totalorder %s12, 0
      %p53 = por %p51, %p52
      %p54 = scmp.ne.s32.totalorder %s46, %s48
      %p55 = scmp.eq.s32.totalorder %s17, 1
      %p56 = por %p54, %p55
      %p57 = scmp.ne.s32.totalorder %s48, %s49
      %p58 = scmp.eq.s32.totalorder %s17, 0
      %p59 = por %p57, %p58
      %p60 = scmp.ne.s32.totalorder %s48, %s49
      %p61 = scmp.eq.s32.totalorder %s18, 1
      %p62 = por %p60, %p61
      %p64 = scmp.ne.s32.totalorder %s49, %s63
      %p65 = scmp.eq.s32.totalorder %s18, 0
      %p66 = por %p64, %p65
      %s68 = sadd.s32 %s67, 1
      %p71 = scmp.eq.s32.totalorder %s12, 1
      %p72 = scmp.ne.s32.totalorder %s67, %s69
      %p73 = scmp.eq.s32.totalorder %s12, 0
      %p74 = por %p72, %p73
      %p75 = scmp.ne.s32.totalorder %s67, %s69
      %p76 = scmp.eq.s32.totalorder %s17, 1
      %p77 = por %p75, %p76
      %p78 = scmp.ne.s32.totalorder %s69, %s70
      %p79 = scmp.eq.s32.totalorder %s17, 0
      %p80 = por %p78, %p79
      %p81 = scmp.ne.s32.totalorder %s69, %s70
      %p82 = scmp.eq.s32.totalorder %s18, 1
      %p83 = por %p81, %p82
      %p85 = scmp.ne.s32.totalorder %s70, %s84
      %p86 = scmp.eq.s32.totalorder %s18, 0
      %p87 = por %p85, %p86
      %s88 = ssub.s32 %s12, %s19
      %p89 = scmp.eq.s32.totalorder %s88, 0
      %s91 = sadd.s32 %s90, 1
      %s92 = scalar_select %p89, %s90, %s91
      %p95 = pneg %p89
      %p96 = scmp.eq.s32.totalorder %s12, 1
      %p97 = por %p95, %p96
      %p98 = scmp.ne.s32.totalorder %s90, %s93
      %p99 = scmp.eq.s32.totalorder %s12, 0
      %p100 = por %p98, %p99
      %p101 = scmp.ne.s32.totalorder %s90, %s93
      %p102 = scmp.eq.s32.totalorder %s17, 1
      %p103 = por %p101, %p102
      %p104 = scmp.ne.s32.totalorder %s93, %s94
      %p105 = scmp.eq.s32.totalorder %s17, 0
      %p106 = por %p104, %p105
      %p107 = scmp.ne.s32.totalorder %s93, %s94
      %p108 = scmp.eq.s32.totalorder %s18, 1
      %p109 = por %p107, %p108
      %p111 = scmp.ne.s32.totalorder %s94, %s110
      %p112 = scmp.eq.s32.totalorder %s18, 0
      %p113 = por %p111, %p112
      %p114 = scmp.le.s32.totalorder 1, %s12
      %p115 = scmp.lt.s32.totalorder %s12, 3
      %p116 = pnand %p114, %p115
      %p117 = pneg %p116
      // Predicated region
      $region9: #{tpu_custom_call.1} parent=5 // pred_check
        _
      $region10: #{tpu_custom_call.1} parent=5 // pred_check_branch
        %119 = sbr.rel (%p116) target = $region12
      $region11: #{tpu_custom_call.1} parent=5 // pred_region
        %s120 = ssub.s32 %s12, 1
        // Predicated region
        $region13: #{tpu_custom_call.1} parent=11 // pred_check
          %p121 = pneg %p59
        $region14: #{tpu_custom_call.1} parent=11 // pred_check_branch
          %123 = sbr.rel (%p121) target = $region16
        $region15: #{tpu_custom_call.1} parent=11 // pred_region
          _
        $region16: #{tpu_custom_call.1} parent=11 // pred_fallthru
          _
        // Predicated region
        $region17: #{tpu_custom_call.1} parent=11 // pred_check
          %p124 = pneg %p80
        $region18: #{tpu_custom_call.1} parent=11 // pred_check_branch
          %126 = sbr.rel (%p124) target = $region20
        $region19: #{tpu_custom_call.1} parent=11 // pred_region
          _
        $region20: #{tpu_custom_call.1} parent=11 // pred_fallthru
          _
      $region12: #{tpu_custom_call.1} parent=5 // pred_fallthru
        _
      %p127 = scmp.lt.s32.totalorder %s12, 2
      // Predicated region
      $region21: #{tpu_custom_call.1} parent=5 // pred_check
        %p128 = pneg %p127
      $region22: #{tpu_custom_call.1} parent=5 // pred_check_branch
        %130 = sbr.rel (%p128) target = $region24
      $region23: #{tpu_custom_call.1} parent=5 // pred_region
        // Predicated region
        $region25: #{tpu_custom_call.1} parent=23 // pred_check
          %p131 = pneg %p32
        $region26: #{tpu_custom_call.1} parent=23 // pred_check_branch
          %133 = sbr.rel (%p131) target = $region28
        $region27: #{tpu_custom_call.1} parent=23 // pred_region
          %s134 = smul.u32 8, %s12
          %p135 = scmp.lt.s32.totalorder %s134, 15
          %s136 = scalar_select %p135, %s134, 15
          %s137 = smul.addr %s136, 8
          %s138 = scalar_lea.vmem %s0, %s137
          %s139 = smul.u32 8, %s12
        $region28: #{tpu_custom_call.1} parent=23 // pred_fallthru
          _
      $region24: #{tpu_custom_call.1} parent=5 // pred_fallthru
        _
      %p140 = scmp.le.s32.totalorder 1, %s12
      %p141 = scmp.lt.s32.totalorder %s12, 3
      %p142 = pnand %p140, %p141
      %p143 = pneg %p142
      // Predicated region
      $region29: #{tpu_custom_call.1} parent=5 // pred_check
        _
      $region30: #{tpu_custom_call.1} parent=5 // pred_check_branch
        %145 = sbr.rel (%p142) target = $region32
      $region31: #{tpu_custom_call.1} parent=5 // pred_region
        %s146 = ssub.s32 %s12, 1
        %s147 = smul.u32 8, %s17
        %p148 = scmp.lt.s32.totalorder %s147, 15
        %s149 = scalar_select %p148, %s147, 15
        %s150 = smul.addr %s149, 8
        %s151 = scalar_lea.vmem %s0, %s150
        %p152 = pneg %p38
        %p153 = pneg %p35
        %p154 = pneg %p59
        %p155 = pneg %p56
        %p156 = pneg %p80
        %p157 = pneg %p77
        %p158 = pneg %p106
        %p159 = pneg %p103
        %s160 = sand.u32 %s93, 1
        %s161 = scalar_lea.sflag [#allocation3], %s160
        %s162 = sand.u32 %s93, 1
        %s163 = smul.addr %s162, 64
        %s164 = scalar_lea.vmem [#allocation2], %s163
        %s165 = smul.u32 8, %s17
        %p166 = scmp.lt.s32.totalorder %s165, 15
        %s167 = scalar_select %p166, %s165, 15
        %s168 = smul.addr %s167, 8
        %s169 = scalar_lea.vmem %s0, %s168
        %s170 = smul.u32 8, %s17
        %s171 = smul.u32 8, %s17
        %v172 = vld [vmem:[%s169] sm:$0xff]
        %v173 = vld [vmem:[%s169 + $0x8] sm:$0xff]
        %v174 = vld [vmem:[%s169 + $0x10] sm:$0xff]
        %v175 = vld [vmem:[%s169 + $0x18] sm:$0xff]
        %v176 = vld [vmem:[%s169 + $0x20] sm:$0xff]
        %v177 = vld [vmem:[%s169 + $0x28] sm:$0xff]
        %v178 = vld [vmem:[%s169 + $0x30] sm:$0xff]
        %v179 = vld [vmem:[%s169 + $0x38] sm:$0xff]
        %v180 = vmin.f32 %v172, 5.0
        %v181 = vmin.f32 %v173, 5.0
        %v182 = vmin.f32 %v174, 5.0
        %v183 = vmin.f32 %v175, 5.0
        %v184 = vmin.f32 %v176, 5.0
        %v185 = vmin.f32 %v177, 5.0
        %v186 = vmin.f32 %v178, 5.0
        %v187 = vmin.f32 %v179, 5.0
        %v188 = vld [vmem:[%s1] sm:$0xff]
        %vm189 = vcmask 64512
        %v191 = vsel %vm189, %v180, 0
        %v194 = vsel %vm189, %v181, 0
        %v197 = vsel %vm189, %v182, 0
        %v200 = vsel %vm189, %v183, 0
        %v203 = vsel %vm189, %v184, 0
        %v206 = vsel %vm189, %v185, 0
        %v209 = vsel %vm189, %v186, 0
        %v212 = vsel %vm189, %v187, 0
        %214 = vmatpush.msra.mxu0 0.0
        %215 = vmatpush.msra.mxu0 0.0
        %216 = vmatpush.msra.mxu0 0.0
        %217 = vmatpush.msra.mxu0 0.0
        %218 = vmatpush.msra.mxu0 0.0
        %219 = vmatpush.msra.mxu0 0.0
        %220 = vmatpush.msra.mxu0 0.0
        %221 = vmatpush.msra.mxu0 0.0
        %222 = vmatpush.msra.mxu0 0.0
        %223 = vmatpush.msra.mxu0 0.0
        %224 = vmatpush.msra.mxu0 0.0
        %225 = vmatpush.msra.mxu0 0.0
        %226 = vmatpush.msra.mxu0 0.0
        %227 = vmatpush.msra.mxu0 0.0
        %228 = vmatpush.msra.mxu0 0.0
        %v229 = vand.u32 %v188, 4294901760
        %230 = vmatpush.msra.mxu0 %v229
        %v231 = vand.u32 %v191, 4294901760
        %v232 = vsub.f32 %v191, %v231
        %v233 = vand.u32 %v232, 4294901760
        %v234 = vsub.f32 %v232, %v233
        %v235 = vand.u32 %v234, 4294901760
        %236 = vmatmul.f32.gmra.mxu0 %v235
        %v237 = vpop.f32.mrf.mxu0
        %v238 = vadd.f32 0.0, %v237
        %v239 = vand.u32 %v194, 4294901760
        %v240 = vsub.f32 %v194, %v239
        %v241 = vand.u32 %v240, 4294901760
        %v242 = vsub.f32 %v240, %v241
        %v243 = vand.u32 %v242, 4294901760
        %244 = vmatmul.f32.gmra.mxu0 %v243
        %v245 = vpop.f32.mrf.mxu0
        %v246 = vadd.f32 0.0, %v245
        %v247 = vand.u32 %v197, 4294901760
        %v248 = vsub.f32 %v197, %v247
        %v249 = vand.u32 %v248, 4294901760
        %v250 = vsub.f32 %v248, %v249
        %v251 = vand.u32 %v250, 4294901760
        %252 = vmatmul.f32.gmra.mxu0 %v251
        %v253 = vpop.f32.mrf.mxu0
        %v254 = vadd.f32 0.0, %v253
        %v255 = vand.u32 %v200, 4294901760
        %v256 = vsub.f32 %v200, %v255
        %v257 = vand.u32 %v256, 4294901760
        %v258 = vsub.f32 %v256, %v257
        %v259 = vand.u32 %v258, 4294901760
        %260 = vmatmul.f32.gmra.mxu0 %v259
        %v261 = vpop.f32.mrf.mxu0
        %v262 = vadd.f32 0.0, %v261
        %v263 = vand.u32 %v203, 4294901760
        %v264 = vsub.f32 %v203, %v263
        %v265 = vand.u32 %v264, 4294901760
        %v266 = vsub.f32 %v264, %v265
        %v267 = vand.u32 %v266, 4294901760
        %268 = vmatmul.f32.gmra.mxu0 %v267
        %v269 = vpop.f32.mrf.mxu0
        %v270 = vadd.f32 0.0, %v269
        %v271 = vand.u32 %v206, 4294901760
        %v272 = vsub.f32 %v206, %v271
        %v273 = vand.u32 %v272, 4294901760
        %v274 = vsub.f32 %v272, %v273
        %v275 = vand.u32 %v274, 4294901760
        %276 = vmatmul.f32.gmra.mxu0 %v275
        %v277 = vpop.f32.mrf.mxu0
        %v278 = vadd.f32 0.0, %v277
        %v279 = vand.u32 %v209, 4294901760
        %v280 = vsub.f32 %v209, %v279
        %v281 = vand.u32 %v280, 4294901760
        %v282 = vsub.f32 %v280, %v281
        %v283 = vand.u32 %v282, 4294901760
        %284 = vmatmul.f32.gmra.mxu0 %v283
        %v285 = vpop.f32.mrf.mxu0
        %v286 = vadd.f32 0.0, %v285
        %v287 = vand.u32 %v212, 4294901760
        %v288 = vsub.f32 %v212, %v287
        %v289 = vand.u32 %v288, 4294901760
        %v290 = vsub.f32 %v288, %v289
        %v291 = vand.u32 %v290, 4294901760
        %292 = vmatmul.f32.gmra.mxu0 %v291
        %v293 = vpop.f32.mrf.mxu0
        %v294 = vadd.f32 0.0, %v293
        %295 = vdwg.mxu0
        %296 = vmatpush.msra.mxu0 0.0
        %297 = vmatpush.msra.mxu0 0.0
        %298 = vmatpush.msra.mxu0 0.0
        %299 = vmatpush.msra.mxu0 0.0
        %300 = vmatpush.msra.mxu0 0.0
        %301 = vmatpush.msra.mxu0 0.0
        %302 = vmatpush.msra.mxu0 0.0
        %303 = vmatpush.msra.mxu0 0.0
        %304 = vmatpush.msra.mxu0 0.0
        %305 = vmatpush.msra.mxu0 0.0
        %306 = vmatpush.msra.mxu0 0.0
        %307 = vmatpush.msra.mxu0 0.0
        %308 = vmatpush.msra.mxu0 0.0
        %309 = vmatpush.msra.mxu0 0.0
        %310 = vmatpush.msra.mxu0 0.0
        %v311 = vand.u32 %v188, 4294901760
        %v312 = vsub.f32 %v188, %v311
        %v313 = vand.u32 %v312, 4294901760
        %v314 = vsub.f32 %v312, %v313
        %v315 = vand.u32 %v314, 4294901760
        %316 = vmatpush.msra.mxu0 %v315
        %v317 = vand.u32 %v191, 4294901760
        %318 = vmatmul.f32.gmra.mxu0 %v317
        %v319 = vpop.f32.mrf.mxu0
        %v320 = vadd.f32 %v238, %v319
        %v321 = vand.u32 %v194, 4294901760
        %322 = vmatmul.f32.gmra.mxu0 %v321
        %v323 = vpop.f32.mrf.mxu0
        %v324 = vadd.f32 %v246, %v323
        %v325 = vand.u32 %v197, 4294901760
        %326 = vmatmul.f32.gmra.mxu0 %v325
        %v327 = vpop.f32.mrf.mxu0
        %v328 = vadd.f32 %v254, %v327
        %v329 = vand.u32 %v200, 4294901760
        %330 = vmatmul.f32.gmra.mxu0 %v329
        %v331 = vpop.f32.mrf.mxu0
        %v332 = vadd.f32 %v262, %v331
        %v333 = vand.u32 %v203, 4294901760
        %334 = vmatmul.f32.gmra.mxu0 %v333
        %v335 = vpop.f32.mrf.mxu0
        %v336 = vadd.f32 %v270, %v335
        %v337 = vand.u32 %v206, 4294901760
        %338 = vmatmul.f32.gmra.mxu0 %v337
        %v339 = vpop.f32.mrf.mxu0
        %v340 = vadd.f32 %v278, %v339
        %v341 = vand.u32 %v209, 4294901760
        %342 = vmatmul.f32.gmra.mxu0 %v341
        %v343 = vpop.f32.mrf.mxu0
        %v344 = vadd.f32 %v286, %v343
        %v345 = vand.u32 %v212, 4294901760
        %346 = vmatmul.f32.gmra.mxu0 %v345
        %v347 = vpop.f32.mrf.mxu0
        %v348 = vadd.f32 %v294, %v347
        %349 = vdwg.mxu0
        %350 = vmatpush.msra.mxu0 0.0
        %351 = vmatpush.msra.mxu0 0.0
        %352 = vmatpush.msra.mxu0 0.0
        %353 = vmatpush.msra.mxu0 0.0
        %354 = vmatpush.msra.mxu0 0.0
        %355 = vmatpush.msra.mxu0 0.0
        %356 = vmatpush.msra.mxu0 0.0
        %357 = vmatpush.msra.mxu0 0.0
        %358 = vmatpush.msra.mxu0 0.0
        %359 = vmatpush.msra.mxu0 0.0
        %360 = vmatpush.msra.mxu0 0.0
        %361 = vmatpush.msra.mxu0 0.0
        %362 = vmatpush.msra.mxu0 0.0
        %363 = vmatpush.msra.mxu0 0.0
        %364 = vmatpush.msra.mxu0 0.0
        %v365 = vand.u32 %v188, 4294901760
        %v366 = vsub.f32 %v188, %v365
        %367 = vmatpush.msra.mxu0 %v366
        %v368 = vand.u32 %v191, 4294901760
        %v369 = vsub.f32 %v191, %v368
        %370 = vmatmul.f32.gmra.mxu0 %v369
        %v371 = vpop.f32.mrf.mxu0
        %v372 = vadd.f32 %v320, %v371
        %v373 = vand.u32 %v194, 4294901760
        %v374 = vsub.f32 %v194, %v373
        %375 = vmatmul.f32.gmra.mxu0 %v374
        %v376 = vpop.f32.mrf.mxu0
        %v377 = vadd.f32 %v324, %v376
        %v378 = vand.u32 %v197, 4294901760
        %v379 = vsub.f32 %v197, %v378
        %380 = vmatmul.f32.gmra.mxu0 %v379
        %v381 = vpop.f32.mrf.mxu0
        %v382 = vadd.f32 %v328, %v381
        %v383 = vand.u32 %v200, 4294901760
        %v384 = vsub.f32 %v200, %v383
        %385 = vmatmul.f32.gmra.mxu0 %v384
        %v386 = vpop.f32.mrf.mxu0
        %v387 = vadd.f32 %v332, %v386
        %v388 = vand.u32 %v203, 4294901760
        %v389 = vsub.f32 %v203, %v388
        %390 = vmatmul.f32.gmra.mxu0 %v389
        %v391 = vpop.f32.mrf.mxu0
        %v392 = vadd.f32 %v336, %v391
        %v393 = vand.u32 %v206, 4294901760
        %v394 = vsub.f32 %v206, %v393
        %395 = vmatmul.f32.gmra.mxu0 %v394
        %v396 = vpop.f32.mrf.mxu0
        %v397 = vadd.f32 %v340, %v396
        %v398 = vand.u32 %v209, 4294901760
        %v399 = vsub.f32 %v209, %v398
        %400 = vmatmul.f32.gmra.mxu0 %v399
        %v401 = vpop.f32.mrf.mxu0
        %v402 = vadd.f32 %v344, %v401
        %v403 = vand.u32 %v212, 4294901760
        %v404 = vsub.f32 %v212, %v403
        %405 = vmatmul.f32.gmra.mxu0 %v404
        %v406 = vpop.f32.mrf.mxu0
        %v407 = vadd.f32 %v348, %v406
        %408 = vdwg.mxu0
        %409 = vmatpush.msra.mxu0 0.0
        %410 = vmatpush.msra.mxu0 0.0
        %411 = vmatpush.msra.mxu0 0.0
        %412 = vmatpush.msra.mxu0 0.0
        %413 = vmatpush.msra.mxu0 0.0
        %414 = vmatpush.msra.mxu0 0.0
        %415 = vmatpush.msra.mxu0 0.0
        %416 = vmatpush.msra.mxu0 0.0
        %417 = vmatpush.msra.mxu0 0.0
        %418 = vmatpush.msra.mxu0 0.0
        %419 = vmatpush.msra.mxu0 0.0
        %420 = vmatpush.msra.mxu0 0.0
        %421 = vmatpush.msra.mxu0 0.0
        %422 = vmatpush.msra.mxu0 0.0
        %423 = vmatpush.msra.mxu0 0.0
        %v424 = vand.u32 %v188, 4294901760
        %425 = vmatpush.msra.mxu0 %v424
        %v426 = vand.u32 %v191, 4294901760
        %v427 = vsub.f32 %v191, %v426
        %v428 = vand.u32 %v427, 4294901760
        %429 = vmatmul.f32.gmra.mxu0 %v428
        %v430 = vpop.f32.mrf.mxu0
        %v431 = vadd.f32 %v372, %v430
        %v432 = vand.u32 %v194, 4294901760
        %v433 = vsub.f32 %v194, %v432
        %v434 = vand.u32 %v433, 4294901760
        %435 = vmatmul.f32.gmra.mxu0 %v434
        %v436 = vpop.f32.mrf.mxu0
        %v437 = vadd.f32 %v377, %v436
        %v438 = vand.u32 %v197, 4294901760
        %v439 = vsub.f32 %v197, %v438
        %v440 = vand.u32 %v439, 4294901760
        %441 = vmatmul.f32.gmra.mxu0 %v440
        %v442 = vpop.f32.mrf.mxu0
        %v443 = vadd.f32 %v382, %v442
        %v444 = vand.u32 %v200, 4294901760
        %v445 = vsub.f32 %v200, %v444
        %v446 = vand.u32 %v445, 4294901760
        %447 = vmatmul.f32.gmra.mxu0 %v446
        %v448 = vpop.f32.mrf.mxu0
        %v449 = vadd.f32 %v387, %v448
        %v450 = vand.u32 %v203, 4294901760
        %v451 = vsub.f32 %v203, %v450
        %v452 = vand.u32 %v451, 4294901760
        %453 = vmatmul.f32.gmra.mxu0 %v452
        %v454 = vpop.f32.mrf.mxu0
        %v455 = vadd.f32 %v392, %v454
        %v456 = vand.u32 %v206, 4294901760
        %v457 = vsub.f32 %v206, %v456
        %v458 = vand.u32 %v457, 4294901760
        %459 = vmatmul.f32.gmra.mxu0 %v458
        %v460 = vpop.f32.mrf.mxu0
        %v461 = vadd.f32 %v397, %v460
        %v462 = vand.u32 %v209, 4294901760
        %v463 = vsub.f32 %v209, %v462
        %v464 = vand.u32 %v463, 4294901760
        %465 = vmatmul.f32.gmra.mxu0 %v464
        %v466 = vpop.f32.mrf.mxu0
        %v467 = vadd.f32 %v402, %v466
        %v468 = vand.u32 %v212, 4294901760
        %v469 = vsub.f32 %v212, %v468
        %v470 = vand.u32 %v469, 4294901760
        %471 = vmatmul.f32.gmra.mxu0 %v470
        %v472 = vpop.f32.mrf.mxu0
        %v473 = vadd.f32 %v407, %v472
        %474 = vdwg.mxu0
        %475 = vmatpush.msra.mxu0 0.0
        %476 = vmatpush.msra.mxu0 0.0
        %477 = vmatpush.msra.mxu0 0.0
        %478 = vmatpush.msra.mxu0 0.0
        %479 = vmatpush.msra.mxu0 0.0
        %480 = vmatpush.msra.mxu0 0.0
        %481 = vmatpush.msra.mxu0 0.0
        %482 = vmatpush.msra.mxu0 0.0
        %483 = vmatpush.msra.mxu0 0.0
        %484 = vmatpush.msra.mxu0 0.0
        %485 = vmatpush.msra.mxu0 0.0
        %486 = vmatpush.msra.mxu0 0.0
        %487 = vmatpush.msra.mxu0 0.0
        %488 = vmatpush.msra.mxu0 0.0
        %489 = vmatpush.msra.mxu0 0.0
        %v490 = vand.u32 %v188, 4294901760
        %v491 = vsub.f32 %v188, %v490
        %v492 = vand.u32 %v491, 4294901760
        %493 = vmatpush.msra.mxu0 %v492
        %v494 = vand.u32 %v191, 4294901760
        %495 = vmatmul.f32.gmra.mxu0 %v494
        %v496 = vpop.f32.mrf.mxu0
        %v497 = vadd.f32 %v431, %v496
        %v498 = vand.u32 %v194, 4294901760
        %499 = vmatmul.f32.gmra.mxu0 %v498
        %v500 = vpop.f32.mrf.mxu0
        %v501 = vadd.f32 %v437, %v500
        %v502 = vand.u32 %v197, 4294901760
        %503 = vmatmul.f32.gmra.mxu0 %v502
        %v504 = vpop.f32.mrf.mxu0
        %v505 = vadd.f32 %v443, %v504
        %v506 = vand.u32 %v200, 4294901760
        %507 = vmatmul.f32.gmra.mxu0 %v506
        %v508 = vpop.f32.mrf.mxu0
        %v509 = vadd.f32 %v449, %v508
        %v510 = vand.u32 %v203, 4294901760
        %511 = vmatmul.f32.gmra.mxu0 %v510
        %v512 = vpop.f32.mrf.mxu0
        %v513 = vadd.f32 %v455, %v512
        %v514 = vand.u32 %v206, 4294901760
        %515 = vmatmul.f32.gmra.mxu0 %v514
        %v516 = vpop.f32.mrf.mxu0
        %v517 = vadd.f32 %v461, %v516
        %v518 = vand.u32 %v209, 4294901760
        %519 = vmatmul.f32.gmra.mxu0 %v518
        %v520 = vpop.f32.mrf.mxu0
        %v521 = vadd.f32 %v467, %v520
        %v522 = vand.u32 %v212, 4294901760
        %523 = vmatmul.f32.gmra.mxu0 %v522
        %v524 = vpop.f32.mrf.mxu0
        %v525 = vadd.f32 %v473, %v524
        %526 = vdwg.mxu0
        %527 = vmatpush.msra.mxu0 0.0
        %528 = vmatpush.msra.mxu0 0.0
        %529 = vmatpush.msra.mxu0 0.0
        %530 = vmatpush.msra.mxu0 0.0
        %531 = vmatpush.msra.mxu0 0.0
        %532 = vmatpush.msra.mxu0 0.0
        %533 = vmatpush.msra.mxu0 0.0
        %534 = vmatpush.msra.mxu0 0.0
        %535 = vmatpush.msra.mxu0 0.0
        %536 = vmatpush.msra.mxu0 0.0
        %537 = vmatpush.msra.mxu0 0.0
        %538 = vmatpush.msra.mxu0 0.0
        %539 = vmatpush.msra.mxu0 0.0
        %540 = vmatpush.msra.mxu0 0.0
        %541 = vmatpush.msra.mxu0 0.0
        %v542 = vand.u32 %v188, 4294901760
        %543 = vmatpush.msra.mxu0 %v542
        %v544 = vand.u32 %v191, 4294901760
        %545 = vmatmul.f32.gmra.mxu0 %v544
        %v546 = vpop.f32.mrf.mxu0
        %v547 = vadd.f32 %v497, %v546
        %v548 = vand.u32 %v194, 4294901760
        %549 = vmatmul.f32.gmra.mxu0 %v548
        %v550 = vpop.f32.mrf.mxu0
        %v551 = vadd.f32 %v501, %v550
        %v552 = vand.u32 %v197, 4294901760
        %553 = vmatmul.f32.gmra.mxu0 %v552
        %v554 = vpop.f32.mrf.mxu0
        %v555 = vadd.f32 %v505, %v554
        %v556 = vand.u32 %v200, 4294901760
        %557 = vmatmul.f32.gmra.mxu0 %v556
        %v558 = vpop.f32.mrf.mxu0
        %v559 = vadd.f32 %v509, %v558
        %v560 = vand.u32 %v203, 4294901760
        %561 = vmatmul.f32.gmra.mxu0 %v560
        %v562 = vpop.f32.mrf.mxu0
        %v563 = vadd.f32 %v513, %v562
        %v564 = vand.u32 %v206, 4294901760
        %565 = vmatmul.f32.gmra.mxu0 %v564
        %v566 = vpop.f32.mrf.mxu0
        %v567 = vadd.f32 %v517, %v566
        %v568 = vand.u32 %v209, 4294901760
        %569 = vmatmul.f32.gmra.mxu0 %v568
        %v570 = vpop.f32.mrf.mxu0
        %v571 = vadd.f32 %v521, %v570
        %v572 = vand.u32 %v212, 4294901760
        %573 = vmatmul.f32.gmra.mxu0 %v572
        %v574 = vpop.f32.mrf.mxu0
        %v575 = vadd.f32 %v525, %v574
        %576 = vdwg.mxu0
        %v577 = vld [vmem:[%s2] sm:$0xff]
        %578 = vmatpush.msra.mxu0 0.0
        %579 = vmatpush.msra.mxu0 0.0
        %580 = vmatpush.msra.mxu0 0.0
        %581 = vmatpush.msra.mxu0 0.0
        %582 = vmatpush.msra.mxu0 0.0
        %583 = vmatpush.msra.mxu0 0.0
        %584 = vmatpush.msra.mxu0 0.0
        %585 = vmatpush.msra.mxu0 0.0
        %586 = vmatpush.msra.mxu0 0.0
        %587 = vmatpush.msra.mxu0 0.0
        %588 = vmatpush.msra.mxu0 0.0
        %589 = vmatpush.msra.mxu0 0.0
        %590 = vmatpush.msra.mxu0 0.0
        %591 = vmatpush.msra.mxu0 0.0
        %592 = vmatpush.msra.mxu0 0.0
        %v593 = vand.u32 %v577, 4294901760
        %594 = vmatpush.msra.mxu0 %v593
        %v595 = vand.u32 %v191, 4294901760
        %v596 = vsub.f32 %v191, %v595
        %v597 = vand.u32 %v596, 4294901760
        %v598 = vsub.f32 %v596, %v597
        %v599 = vand.u32 %v598, 4294901760
        %600 = vmatmul.f32.gmra.mxu0 %v599
        %v601 = vpop.f32.mrf.mxu0
        %v602 = vadd.f32 0.0, %v601
        %v603 = vand.u32 %v194, 4294901760
        %v604 = vsub.f32 %v194, %v603
        %v605 = vand.u32 %v604, 4294901760
        %v606 = vsub.f32 %v604, %v605
        %v607 = vand.u32 %v606, 4294901760
        %608 = vmatmul.f32.gmra.mxu0 %v607
        %v609 = vpop.f32.mrf.mxu0
        %v610 = vadd.f32 0.0, %v609
        %v611 = vand.u32 %v197, 4294901760
        %v612 = vsub.f32 %v197, %v611
        %v613 = vand.u32 %v612, 4294901760
        %v614 = vsub.f32 %v612, %v613
        %v615 = vand.u32 %v614, 4294901760
        %616 = vmatmul.f32.gmra.mxu0 %v615
        %v617 = vpop.f32.mrf.mxu0
        %v618 = vadd.f32 0.0, %v617
        %v619 = vand.u32 %v200, 4294901760
        %v620 = vsub.f32 %v200, %v619
        %v621 = vand.u32 %v620, 4294901760
        %v622 = vsub.f32 %v620, %v621
        %v623 = vand.u32 %v622, 4294901760
        %624 = vmatmul.f32.gmra.mxu0 %v623
        %v625 = vpop.f32.mrf.mxu0
        %v626 = vadd.f32 0.0, %v625
        %v627 = vand.u32 %v203, 4294901760
        %v628 = vsub.f32 %v203, %v627
        %v629 = vand.u32 %v628, 4294901760
        %v630 = vsub.f32 %v628, %v629
        %v631 = vand.u32 %v630, 4294901760
        %632 = vmatmul.f32.gmra.mxu0 %v631
        %v633 = vpop.f32.mrf.mxu0
        %v634 = vadd.f32 0.0, %v633
        %v635 = vand.u32 %v206, 4294901760
        %v636 = vsub.f32 %v206, %v635
        %v637 = vand.u32 %v636, 4294901760
        %v638 = vsub.f32 %v636, %v637
        %v639 = vand.u32 %v638, 4294901760
        %640 = vmatmul.f32.gmra.mxu0 %v639
        %v641 = vpop.f32.mrf.mxu0
        %v642 = vadd.f32 0.0, %v641
        %v643 = vand.u32 %v209, 4294901760
        %v644 = vsub.f32 %v209, %v643
        %v645 = vand.u32 %v644, 4294901760
        %v646 = vsub.f32 %v644, %v645
        %v647 = vand.u32 %v646, 4294901760
        %648 = vmatmul.f32.gmra.mxu0 %v647
        %v649 = vpop.f32.mrf.mxu0
        %v650 = vadd.f32 0.0, %v649
        %v651 = vand.u32 %v212, 4294901760
        %v652 = vsub.f32 %v212, %v651
        %v653 = vand.u32 %v652, 4294901760
        %v654 = vsub.f32 %v652, %v653
        %v655 = vand.u32 %v654, 4294901760
        %656 = vmatmul.f32.gmra.mxu0 %v655
        %v657 = vpop.f32.mrf.mxu0
        %v658 = vadd.f32 0.0, %v657
        %659 = vdwg.mxu0
        %660 = vmatpush.msra.mxu0 0.0
        %661 = vmatpush.msra.mxu0 0.0
        %662 = vmatpush.msra.mxu0 0.0
        %663 = vmatpush.msra.mxu0 0.0
        %664 = vmatpush.msra.mxu0 0.0
        %665 = vmatpush.msra.mxu0 0.0
        %666 = vmatpush.msra.mxu0 0.0
        %667 = vmatpush.msra.mxu0 0.0
        %668 = vmatpush.msra.mxu0 0.0
        %669 = vmatpush.msra.mxu0 0.0
        %670 = vmatpush.msra.mxu0 0.0
        %671 = vmatpush.msra.mxu0 0.0
        %672 = vmatpush.msra.mxu0 0.0
        %673 = vmatpush.msra.mxu0 0.0
        %674 = vmatpush.msra.mxu0 0.0
        %v675 = vand.u32 %v577, 4294901760
        %v676 = vsub.f32 %v577, %v675
        %v677 = vand.u32 %v676, 4294901760
        %v678 = vsub.f32 %v676, %v677
        %v679 = vand.u32 %v678, 4294901760
        %680 = vmatpush.msra.mxu0 %v679
        %v681 = vand.u32 %v191, 4294901760
        %682 = vmatmul.f32.gmra.mxu0 %v681
        %v683 = vpop.f32.mrf.mxu0
        %v684 = vadd.f32 %v602, %v683
        %v685 = vand.u32 %v194, 4294901760
        %686 = vmatmul.f32.gmra.mxu0 %v685
        %v687 = vpop.f32.mrf.mxu0
        %v688 = vadd.f32 %v610, %v687
        %v689 = vand.u32 %v197, 4294901760
        %690 = vmatmul.f32.gmra.mxu0 %v689
        %v691 = vpop.f32.mrf.mxu0
        %v692 = vadd.f32 %v618, %v691
        %v693 = vand.u32 %v200, 4294901760
        %694 = vmatmul.f32.gmra.mxu0 %v693
        %v695 = vpop.f32.mrf.mxu0
        %v696 = vadd.f32 %v626, %v695
        %v697 = vand.u32 %v203, 4294901760
        %698 = vmatmul.f32.gmra.mxu0 %v697
        %v699 = vpop.f32.mrf.mxu0
        %v700 = vadd.f32 %v634, %v699
        %v701 = vand.u32 %v206, 4294901760
        %702 = vmatmul.f32.gmra.mxu0 %v701
        %v703 = vpop.f32.mrf.mxu0
        %v704 = vadd.f32 %v642, %v703
        %v705 = vand.u32 %v209, 4294901760
        %706 = vmatmul.f32.gmra.mxu0 %v705
        %v707 = vpop.f32.mrf.mxu0
        %v708 = vadd.f32 %v650, %v707
        %v709 = vand.u32 %v212, 4294901760
        %710 = vmatmul.f32.gmra.mxu0 %v709
        %v711 = vpop.f32.mrf.mxu0
        %v712 = vadd.f32 %v658, %v711
        %713 = vdwg.mxu0
        %714 = vmatpush.msra.mxu0 0.0
        %715 = vmatpush.msra.mxu0 0.0
        %716 = vmatpush.msra.mxu0 0.0
        %717 = vmatpush.msra.mxu0 0.0
        %718 = vmatpush.msra.mxu0 0.0
        %719 = vmatpush.msra.mxu0 0.0
        %720 = vmatpush.msra.mxu0 0.0
        %721 = vmatpush.msra.mxu0 0.0
        %722 = vmatpush.msra.mxu0 0.0
        %723 = vmatpush.msra.mxu0 0.0
        %724 = vmatpush.msra.mxu0 0.0
        %725 = vmatpush.msra.mxu0 0.0
        %726 = vmatpush.msra.mxu0 0.0
        %727 = vmatpush.msra.mxu0 0.0
        %728 = vmatpush.msra.mxu0 0.0
        %v729 = vand.u32 %v577, 4294901760
        %v730 = vsub.f32 %v577, %v729
        %731 = vmatpush.msra.mxu0 %v730
        %v732 = vand.u32 %v191, 4294901760
        %v733 = vsub.f32 %v191, %v732
        %734 = vmatmul.f32.gmra.mxu0 %v733
        %v735 = vpop.f32.mrf.mxu0
        %v736 = vadd.f32 %v684, %v735
        %v737 = vand.u32 %v194, 4294901760
        %v738 = vsub.f32 %v194, %v737
        %739 = vmatmul.f32.gmra.mxu0 %v738
        %v740 = vpop.f32.mrf.mxu0
        %v741 = vadd.f32 %v688, %v740
        %v742 = vand.u32 %v197, 4294901760
        %v743 = vsub.f32 %v197, %v742
        %744 = vmatmul.f32.gmra.mxu0 %v743
        %v745 = vpop.f32.mrf.mxu0
        %v746 = vadd.f32 %v692, %v745
        %v747 = vand.u32 %v200, 4294901760
        %v748 = vsub.f32 %v200, %v747
        %749 = vmatmul.f32.gmra.mxu0 %v748
        %v750 = vpop.f32.mrf.mxu0
        %v751 = vadd.f32 %v696, %v750
        %v752 = vand.u32 %v203, 4294901760
        %v753 = vsub.f32 %v203, %v752
        %754 = vmatmul.f32.gmra.mxu0 %v753
        %v755 = vpop.f32.mrf.mxu0
        %v756 = vadd.f32 %v700, %v755
        %v757 = vand.u32 %v206, 4294901760
        %v758 = vsub.f32 %v206, %v757
        %759 = vmatmul.f32.gmra.mxu0 %v758
        %v760 = vpop.f32.mrf.mxu0
        %v761 = vadd.f32 %v704, %v760
        %v762 = vand.u32 %v209, 4294901760
        %v763 = vsub.f32 %v209, %v762
        %764 = vmatmul.f32.gmra.mxu0 %v763
        %v765 = vpop.f32.mrf.mxu0
        %v766 = vadd.f32 %v708, %v765
        %v767 = vand.u32 %v212, 4294901760
        %v768 = vsub.f32 %v212, %v767
        %769 = vmatmul.f32.gmra.mxu0 %v768
        %v770 = vpop.f32.mrf.mxu0
        %v771 = vadd.f32 %v712, %v770
        %772 = vdwg.mxu0
        %773 = vmatpush.msra.mxu0 0.0
        %774 = vmatpush.msra.mxu0 0.0
        %775 = vmatpush.msra.mxu0 0.0
        %776 = vmatpush.msra.mxu0 0.0
        %777 = vmatpush.msra.mxu0 0.0
        %778 = vmatpush.msra.mxu0 0.0
        %779 = vmatpush.msra.mxu0 0.0
        %780 = vmatpush.msra.mxu0 0.0
        %781 = vmatpush.msra.mxu0 0.0
        %782 = vmatpush.msra.mxu0 0.0
        %783 = vmatpush.msra.mxu0 0.0
        %784 = vmatpush.msra.mxu0 0.0
        %785 = vmatpush.msra.mxu0 0.0
        %786 = vmatpush.msra.mxu0 0.0
        %787 = vmatpush.msra.mxu0 0.0
        %v788 = vand.u32 %v577, 4294901760
        %789 = vmatpush.msra.mxu0 %v788
        %v790 = vand.u32 %v191, 4294901760
        %v791 = vsub.f32 %v191, %v790
        %v792 = vand.u32 %v791, 4294901760
        %793 = vmatmul.f32.gmra.mxu0 %v792
        %v794 = vpop.f32.mrf.mxu0
        %v795 = vadd.f32 %v736, %v794
        %v796 = vand.u32 %v194, 4294901760
        %v797 = vsub.f32 %v194, %v796
        %v798 = vand.u32 %v797, 4294901760
        %799 = vmatmul.f32.gmra.mxu0 %v798
        %v800 = vpop.f32.mrf.mxu0
        %v801 = vadd.f32 %v741, %v800
        %v802 = vand.u32 %v197, 4294901760
        %v803 = vsub.f32 %v197, %v802
        %v804 = vand.u32 %v803, 4294901760
        %805 = vmatmul.f32.gmra.mxu0 %v804
        %v806 = vpop.f32.mrf.mxu0
        %v807 = vadd.f32 %v746, %v806
        %v808 = vand.u32 %v200, 4294901760
        %v809 = vsub.f32 %v200, %v808
        %v810 = vand.u32 %v809, 4294901760
        %811 = vmatmul.f32.gmra.mxu0 %v810
        %v812 = vpop.f32.mrf.mxu0
        %v813 = vadd.f32 %v751, %v812
        %v814 = vand.u32 %v203, 4294901760
        %v815 = vsub.f32 %v203, %v814
        %v816 = vand.u32 %v815, 4294901760
        %817 = vmatmul.f32.gmra.mxu0 %v816
        %v818 = vpop.f32.mrf.mxu0
        %v819 = vadd.f32 %v756, %v818
        %v820 = vand.u32 %v206, 4294901760
        %v821 = vsub.f32 %v206, %v820
        %v822 = vand.u32 %v821, 4294901760
        %823 = vmatmul.f32.gmra.mxu0 %v822
        %v824 = vpop.f32.mrf.mxu0
        %v825 = vadd.f32 %v761, %v824
        %v826 = vand.u32 %v209, 4294901760
        %v827 = vsub.f32 %v209, %v826
        %v828 = vand.u32 %v827, 4294901760
        %829 = vmatmul.f32.gmra.mxu0 %v828
        %v830 = vpop.f32.mrf.mxu0
        %v831 = vadd.f32 %v766, %v830
        %v832 = vand.u32 %v212, 4294901760
        %v833 = vsub.f32 %v212, %v832
        %v834 = vand.u32 %v833, 4294901760
        %835 = vmatmul.f32.gmra.mxu0 %v834
        %v836 = vpop.f32.mrf.mxu0
        %v837 = vadd.f32 %v771, %v836
        %838 = vdwg.mxu0
        %839 = vmatpush.msra.mxu0 0.0
        %840 = vmatpush.msra.mxu0 0.0
        %841 = vmatpush.msra.mxu0 0.0
        %842 = vmatpush.msra.mxu0 0.0
        %843 = vmatpush.msra.mxu0 0.0
        %844 = vmatpush.msra.mxu0 0.0
        %845 = vmatpush.msra.mxu0 0.0
        %846 = vmatpush.msra.mxu0 0.0
        %847 = vmatpush.msra.mxu0 0.0
        %848 = vmatpush.msra.mxu0 0.0
        %849 = vmatpush.msra.mxu0 0.0
        %850 = vmatpush.msra.mxu0 0.0
        %851 = vmatpush.msra.mxu0 0.0
        %852 = vmatpush.msra.mxu0 0.0
        %853 = vmatpush.msra.mxu0 0.0
        %v854 = vand.u32 %v577, 4294901760
        %v855 = vsub.f32 %v577, %v854
        %v856 = vand.u32 %v855, 4294901760
        %857 = vmatpush.msra.mxu0 %v856
        %v858 = vand.u32 %v191, 4294901760
        %859 = vmatmul.f32.gmra.mxu0 %v858
        %v860 = vpop.f32.mrf.mxu0
        %v861 = vadd.f32 %v795, %v860
        %v862 = vand.u32 %v194, 4294901760
        %863 = vmatmul.f32.gmra.mxu0 %v862
        %v864 = vpop.f32.mrf.mxu0
        %v865 = vadd.f32 %v801, %v864
        %v866 = vand.u32 %v197, 4294901760
        %867 = vmatmul.f32.gmra.mxu0 %v866
        %v868 = vpop.f32.mrf.mxu0
        %v869 = vadd.f32 %v807, %v868
        %v870 = vand.u32 %v200, 4294901760
        %871 = vmatmul.f32.gmra.mxu0 %v870
        %v872 = vpop.f32.mrf.mxu0
        %v873 = vadd.f32 %v813, %v872
        %v874 = vand.u32 %v203, 4294901760
        %875 = vmatmul.f32.gmra.mxu0 %v874
        %v876 = vpop.f32.mrf.mxu0
        %v877 = vadd.f32 %v819, %v876
        %v878 = vand.u32 %v206, 4294901760
        %879 = vmatmul.f32.gmra.mxu0 %v878
        %v880 = vpop.f32.mrf.mxu0
        %v881 = vadd.f32 %v825, %v880
        %v882 = vand.u32 %v209, 4294901760
        %883 = vmatmul.f32.gmra.mxu0 %v882
        %v884 = vpop.f32.mrf.mxu0
        %v885 = vadd.f32 %v831, %v884
        %v886 = vand.u32 %v212, 4294901760
        %887 = vmatmul.f32.gmra.mxu0 %v886
        %v888 = vpop.f32.mrf.mxu0
        %v889 = vadd.f32 %v837, %v888
        %890 = vdwg.mxu0
        %891 = vmatpush.msra.mxu0 0.0
        %892 = vmatpush.msra.mxu0 0.0
        %893 = vmatpush.msra.mxu0 0.0
        %894 = vmatpush.msra.mxu0 0.0
        %895 = vmatpush.msra.mxu0 0.0
        %896 = vmatpush.msra.mxu0 0.0
        %897 = vmatpush.msra.mxu0 0.0
        %898 = vmatpush.msra.mxu0 0.0
        %899 = vmatpush.msra.mxu0 0.0
        %900 = vmatpush.msra.mxu0 0.0
        %901 = vmatpush.msra.mxu0 0.0
        %902 = vmatpush.msra.mxu0 0.0
        %903 = vmatpush.msra.mxu0 0.0
        %904 = vmatpush.msra.mxu0 0.0
        %905 = vmatpush.msra.mxu0 0.0
        %v906 = vand.u32 %v577, 4294901760
        %907 = vmatpush.msra.mxu0 %v906
        %v908 = vand.u32 %v191, 4294901760
        %909 = vmatmul.f32.gmra.mxu0 %v908
        %v910 = vpop.f32.mrf.mxu0
        %v911 = vadd.f32 %v861, %v910
        %v912 = vand.u32 %v194, 4294901760
        %913 = vmatmul.f32.gmra.mxu0 %v912
        %v914 = vpop.f32.mrf.mxu0
        %v915 = vadd.f32 %v865, %v914
        %v916 = vand.u32 %v197, 4294901760
        %917 = vmatmul.f32.gmra.mxu0 %v916
        %v918 = vpop.f32.mrf.mxu0
        %v919 = vadd.f32 %v869, %v918
        %v920 = vand.u32 %v200, 4294901760
        %921 = vmatmul.f32.gmra.mxu0 %v920
        %v922 = vpop.f32.mrf.mxu0
        %v923 = vadd.f32 %v873, %v922
        %v924 = vand.u32 %v203, 4294901760
        %925 = vmatmul.f32.gmra.mxu0 %v924
        %v926 = vpop.f32.mrf.mxu0
        %v927 = vadd.f32 %v877, %v926
        %v928 = vand.u32 %v206, 4294901760
        %929 = vmatmul.f32.gmra.mxu0 %v928
        %v930 = vpop.f32.mrf.mxu0
        %v931 = vadd.f32 %v881, %v930
        %v932 = vand.u32 %v209, 4294901760
        %933 = vmatmul.f32.gmra.mxu0 %v932
        %v934 = vpop.f32.mrf.mxu0
        %v935 = vadd.f32 %v885, %v934
        %v936 = vand.u32 %v212, 4294901760
        %937 = vmatmul.f32.gmra.mxu0 %v936
        %v938 = vpop.f32.mrf.mxu0
        %v939 = vadd.f32 %v889, %v938
        %940 = vdwg.mxu0
        %v941 = vmul.f32 %v547, %v547
        %v942 = vmul.f32 %v551, %v551
        %v943 = vmul.f32 %v555, %v555
        %v944 = vmul.f32 %v559, %v559
        %v945 = vmul.f32 %v563, %v563
        %v946 = vmul.f32 %v567, %v567
        %v947 = vmul.f32 %v571, %v571
        %v948 = vmul.f32 %v575, %v575
        %v949 = vmul.f32 %v941, %v941
        %v950 = vmul.f32 %v942, %v942
        %v951 = vmul.f32 %v943, %v943
        %v952 = vmul.f32 %v944, %v944
        %v953 = vmul.f32 %v945, %v945
        %v954 = vmul.f32 %v946, %v946
        %v955 = vmul.f32 %v947, %v947
        %v956 = vmul.f32 %v948, %v948
        %v957 = vmul.f32 %v547, %v949
        %v958 = vmul.f32 %v551, %v950
        %v959 = vmul.f32 %v555, %v951
        %v960 = vmul.f32 %v559, %v952
        %v961 = vmul.f32 %v563, %v953
        %v962 = vmul.f32 %v567, %v954
        %v963 = vmul.f32 %v571, %v955
        %v964 = vmul.f32 %v575, %v956
        %v965 = vmul.f32 %v547, -1.8973666
        %v966 = vmul.f32 %v551, -1.8973666
        %v967 = vmul.f32 %v555, -1.8973666
        %v968 = vmul.f32 %v559, -1.8973666
        %v969 = vmul.f32 %v563, -1.8973666
        %v970 = vmul.f32 %v567, -1.8973666
        %v971 = vmul.f32 %v571, -1.8973666
        %v972 = vmul.f32 %v575, -1.8973666
        %v973 = vadd.f32 %v965, 4.427189
        %v974 = vadd.f32 %v966, 4.427189
        %v975 = vadd.f32 %v967, 4.427189
        %v976 = vadd.f32 %v968, 4.427189
        %v977 = vadd.f32 %v969, 4.427189
        %v978 = vadd.f32 %v970, 4.427189
        %v979 = vadd.f32 %v971, 4.427189
        %v980 = vadd.f32 %v972, 4.427189
        %v981 = vmul.f32 %v547, %v973
        %v982 = vmul.f32 %v551, %v974
        %v983 = vmul.f32 %v555, %v975
        %v984 = vmul.f32 %v559, %v976
        %v985 = vmul.f32 %v563, %v977
        %v986 = vmul.f32 %v567, %v978
        %v987 = vmul.f32 %v571, %v979
        %v988 = vmul.f32 %v575, %v980
        %v989 = vadd.f32 %v981, -2.6563132
        %v990 = vadd.f32 %v982, -2.6563132
        %v991 = vadd.f32 %v983, -2.6563132
        %v992 = vadd.f32 %v984, -2.6563132
        %v993 = vadd.f32 %v985, -2.6563132
        %v994 = vadd.f32 %v986, -2.6563132
        %v995 = vadd.f32 %v987, -2.6563132
        %v996 = vadd.f32 %v988, -2.6563132
        %v997 = vmul.f32 %v957, %v989
        %v998 = vmul.f32 %v958, %v990
        %v999 = vmul.f32 %v959, %v991
        %v1000 = vmul.f32 %v960, %v992
        %v1001 = vmul.f32 %v961, %v993
        %v1002 = vmul.f32 %v962, %v994
        %v1003 = vmul.f32 %v963, %v995
        %v1004 = vmul.f32 %v964, %v996
        %v1005 = vadd.f32 %v997, 0.1264911
        %v1006 = vadd.f32 %v998, 0.1264911
        %v1007 = vadd.f32 %v999, 0.1264911
        %v1008 = vadd.f32 %v1000, 0.1264911
        %v1009 = vadd.f32 %v1001, 0.1264911
        %v1010 = vadd.f32 %v1002, 0.1264911
        %v1011 = vadd.f32 %v1003, 0.1264911
        %v1012 = vadd.f32 %v1004, 0.1264911
        %vm1013 = vcmp.lt.f32.partialorder %v547, 1.0
        %vm1014 = vcmp.lt.f32.partialorder %v551, 1.0
        %vm1015 = vcmp.lt.f32.partialorder %v555, 1.0
        %vm1016 = vcmp.lt.f32.partialorder %v559, 1.0
        %vm1017 = vcmp.lt.f32.partialorder %v563, 1.0
        %vm1018 = vcmp.lt.f32.partialorder %v567, 1.0
        %vm1019 = vcmp.lt.f32.partialorder %v571, 1.0
        %vm1020 = vcmp.lt.f32.partialorder %v575, 1.0
        %v1021 = vsel %vm1013, %v1005, 0.0
        %v1022 = vsel %vm1014, %v1006, 0.0
        %v1023 = vsel %vm1015, %v1007, 0.0
        %v1024 = vsel %vm1016, %v1008, 0.0
        %v1025 = vsel %vm1017, %v1009, 0.0
        %v1026 = vsel %vm1018, %v1010, 0.0
        %v1027 = vsel %vm1019, %v1011, 0.0
        %v1028 = vsel %vm1020, %v1012, 0.0
        %v1029 = vrcp.pop %v547
        %v1030 = vrcp.pop %v551
        %v1031 = vrcp.pop %v555
        %v1032 = vrcp.pop %v559
        %v1033 = vrcp.pop %v563
        %v1034 = vrcp.pop %v567
        %v1035 = vrcp.pop %v571
        %v1036 = vrcp.pop %v575
        %v1037 = vmul.f32 %v547, %v1029
        %v1038 = vmul.f32 %v551, %v1030
        %v1039 = vmul.f32 %v555, %v1031
        %v1040 = vmul.f32 %v559, %v1032
        %v1041 = vmul.f32 %v563, %v1033
        %v1042 = vmul.f32 %v567, %v1034
        %v1043 = vmul.f32 %v571, %v1035
        %v1044 = vmul.f32 %v575, %v1036
        %v1045 = vsub.f32 2.0, %v1037
        %v1046 = vsub.f32 2.0, %v1038
        %v1047 = vsub.f32 2.0, %v1039
        %v1048 = vsub.f32 2.0, %v1040
        %v1049 = vsub.f32 2.0, %v1041
        %v1050 = vsub.f32 2.0, %v1042
        %v1051 = vsub.f32 2.0, %v1043
        %v1052 = vsub.f32 2.0, %v1044
        %v1053 = vmul.f32 %v1029, %v1045
        %v1054 = vmul.f32 %v1030, %v1046
        %v1055 = vmul.f32 %v1031, %v1047
        %v1056 = vmul.f32 %v1032, %v1048
        %v1057 = vmul.f32 %v1033, %v1049
        %v1058 = vmul.f32 %v1034, %v1050
        %v1059 = vmul.f32 %v1035, %v1051
        %v1060 = vmul.f32 %v1036, %v1052
        %v1061 = vmul.f32 %v1021, %v1053
        %v1062 = vmul.f32 %v1022, %v1054
        %v1063 = vmul.f32 %v1023, %v1055
        %v1064 = vmul.f32 %v1024, %v1056
        %v1065 = vmul.f32 %v1025, %v1057
        %v1066 = vmul.f32 %v1026, %v1058
        %v1067 = vmul.f32 %v1027, %v1059
        %v1068 = vmul.f32 %v1028, %v1060
        %v1069 = vmul.f32 %v911, 0.31830987
        %v1070 = vmul.f32 %v915, 0.31830987
        %v1071 = vmul.f32 %v919, 0.31830987
        %v1072 = vmul.f32 %v923, 0.31830987
        %v1073 = vmul.f32 %v927, 0.31830987
        %v1074 = vmul.f32 %v931, 0.31830987
        %v1075 = vmul.f32 %v935, 0.31830987
        %v1076 = vmul.f32 %v939, 0.31830987
        %v1077 = vadd.f32 %v1069, 0.5
        %v1078 = vadd.f32 %v1070, 0.5
        %v1079 = vadd.f32 %v1071, 0.5
        %v1080 = vadd.f32 %v1072, 0.5
        %v1081 = vadd.f32 %v1073, 0.5
        %v1082 = vadd.f32 %v1074, 0.5
        %v1083 = vadd.f32 %v1075, 0.5
        %v1084 = vadd.f32 %v1076, 0.5
        %v1085 = vfloor.f32 %v1077
        %v1086 = vfloor.f32 %v1078
        %v1087 = vfloor.f32 %v1079
        %v1088 = vfloor.f32 %v1080
        %v1089 = vfloor.f32 %v1081
        %v1090 = vfloor.f32 %v1082
        %v1091 = vfloor.f32 %v1083
        %v1092 = vfloor.f32 %v1084
        %v1093 = vmul.f32 %v1085, 3.140625
        %v1094 = vmul.f32 %v1086, 3.140625
        %v1095 = vmul.f32 %v1087, 3.140625
        %v1096 = vmul.f32 %v1088, 3.140625
        %v1097 = vmul.f32 %v1089, 3.140625
        %v1098 = vmul.f32 %v1090, 3.140625
        %v1099 = vmul.f32 %v1091, 3.140625
        %v1100 = vmul.f32 %v1092, 3.140625
        %v1101 = vsub.f32 %v911, %v1093
        %v1102 = vsub.f32 %v915, %v1094
        %v1103 = vsub.f32 %v919, %v1095
        %v1104 = vsub.f32 %v923, %v1096
        %v1105 = vsub.f32 %v927, %v1097
        %v1106 = vsub.f32 %v931, %v1098
        %v1107 = vsub.f32 %v935, %v1099
        %v1108 = vsub.f32 %v939, %v1100
        %v1109 = vmul.f32 %v1085, 0.0009676536
        %v1110 = vmul.f32 %v1086, 0.0009676536
        %v1111 = vmul.f32 %v1087, 0.0009676536
        %v1112 = vmul.f32 %v1088, 0.0009676536
        %v1113 = vmul.f32 %v1089, 0.0009676536
        %v1114 = vmul.f32 %v1090, 0.0009676536
        %v1115 = vmul.f32 %v1091, 0.0009676536
        %v1116 = vmul.f32 %v1092, 0.0009676536
        %v1117 = vsub.f32 %v1101, %v1109
        %v1118 = vsub.f32 %v1102, %v1110
        %v1119 = vsub.f32 %v1103, %v1111
        %v1120 = vsub.f32 %v1104, %v1112
        %v1121 = vsub.f32 %v1105, %v1113
        %v1122 = vsub.f32 %v1106, %v1114
        %v1123 = vsub.f32 %v1107, %v1115
        %v1124 = vsub.f32 %v1108, %v1116
        %v1125 = vmul.f32 %v1117, %v1117
        %v1126 = vmul.f32 %v1118, %v1118
        %v1127 = vmul.f32 %v1119, %v1119
        %v1128 = vmul.f32 %v1120, %v1120
        %v1129 = vmul.f32 %v1121, %v1121
        %v1130 = vmul.f32 %v1122, %v1122
        %v1131 = vmul.f32 %v1123, %v1123
        %v1132 = vmul.f32 %v1124, %v1124
        %v1133 = vmul.f32 %v1125, -2.5052108e-08
        %v1134 = vmul.f32 %v1126, -2.5052108e-08
        %v1135 = vmul.f32 %v1127, -2.5052108e-08
        %v1136 = vmul.f32 %v1128, -2.5052108e-08
        %v1137 = vmul.f32 %v1129, -2.5052108e-08
        %v1138 = vmul.f32 %v1130, -2.5052108e-08
        %v1139 = vmul.f32 %v1131, -2.5052108e-08
        %v1140 = vmul.f32 %v1132, -2.5052108e-08
        %v1141 = vadd.f32 %v1133, 2.7557319e-06
        %v1142 = vadd.f32 %v1134, 2.7557319e-06
        %v1143 = vadd.f32 %v1135, 2.7557319e-06
        %v1144 = vadd.f32 %v1136, 2.7557319e-06
        %v1145 = vadd.f32 %v1137, 2.7557319e-06
        %v1146 = vadd.f32 %v1138, 2.7557319e-06
        %v1147 = vadd.f32 %v1139, 2.7557319e-06
        %v1148 = vadd.f32 %v1140, 2.7557319e-06
        %v1149 = vmul.f32 %v1141, %v1125
        %v1150 = vmul.f32 %v1142, %v1126
        %v1151 = vmul.f32 %v1143, %v1127
        %v1152 = vmul.f32 %v1144, %v1128
        %v1153 = vmul.f32 %v1145, %v1129
        %v1154 = vmul.f32 %v1146, %v1130
        %v1155 = vmul.f32 %v1147, %v1131
        %v1156 = vmul.f32 %v1148, %v1132
        %v1157 = vadd.f32 %v1149, -0.0001984127
        %v1158 = vadd.f32 %v1150, -0.0001984127
        %v1159 = vadd.f32 %v1151, -0.0001984127
        %v1160 = vadd.f32 %v1152, -0.0001984127
        %v1161 = vadd.f32 %v1153, -0.0001984127
        %v1162 = vadd.f32 %v1154, -0.0001984127
        %v1163 = vadd.f32 %v1155, -0.0001984127
        %v1164 = vadd.f32 %v1156, -0.0001984127
        %v1165 = vmul.f32 %v1157, %v1125
        %v1166 = vmul.f32 %v1158, %v1126
        %v1167 = vmul.f32 %v1159, %v1127
        %v1168 = vmul.f32 %v1160, %v1128
        %v1169 = vmul.f32 %v1161, %v1129
        %v1170 = vmul.f32 %v1162, %v1130
        %v1171 = vmul.f32 %v1163, %v1131
        %v1172 = vmul.f32 %v1164, %v1132
        %v1173 = vadd.f32 %v1165, 0.008333334
        %v1174 = vadd.f32 %v1166, 0.008333334
        %v1175 = vadd.f32 %v1167, 0.008333334
        %v1176 = vadd.f32 %v1168, 0.008333334
        %v1177 = vadd.f32 %v1169, 0.008333334
        %v1178 = vadd.f32 %v1170, 0.008333334
        %v1179 = vadd.f32 %v1171, 0.008333334
        %v1180 = vadd.f32 %v1172, 0.008333334
        %v1181 = vmul.f32 %v1173, %v1125
        %v1182 = vmul.f32 %v1174, %v1126
        %v1183 = vmul.f32 %v1175, %v1127
        %v1184 = vmul.f32 %v1176, %v1128
        %v1185 = vmul.f32 %v1177, %v1129
        %v1186 = vmul.f32 %v1178, %v1130
        %v1187 = vmul.f32 %v1179, %v1131
        %v1188 = vmul.f32 %v1180, %v1132
        %v1189 = vadd.f32 %v1181, -0.16666667
        %v1190 = vadd.f32 %v1182, -0.16666667
        %v1191 = vadd.f32 %v1183, -0.16666667
        %v1192 = vadd.f32 %v1184, -0.16666667
        %v1193 = vadd.f32 %v1185, -0.16666667
        %v1194 = vadd.f32 %v1186, -0.16666667
        %v1195 = vadd.f32 %v1187, -0.16666667
        %v1196 = vadd.f32 %v1188, -0.16666667
        %v1197 = vmul.f32 %v1117, %v1125
        %v1198 = vmul.f32 %v1118, %v1126
        %v1199 = vmul.f32 %v1119, %v1127
        %v1200 = vmul.f32 %v1120, %v1128
        %v1201 = vmul.f32 %v1121, %v1129
        %v1202 = vmul.f32 %v1122, %v1130
        %v1203 = vmul.f32 %v1123, %v1131
        %v1204 = vmul.f32 %v1124, %v1132
        %v1205 = vmul.f32 %v1197, %v1189
        %v1206 = vmul.f32 %v1198, %v1190
        %v1207 = vmul.f32 %v1199, %v1191
        %v1208 = vmul.f32 %v1200, %v1192
        %v1209 = vmul.f32 %v1201, %v1193
        %v1210 = vmul.f32 %v1202, %v1194
        %v1211 = vmul.f32 %v1203, %v1195
        %v1212 = vmul.f32 %v1204, %v1196
        %v1213 = vadd.f32 %v1117, %v1205
        %v1214 = vadd.f32 %v1118, %v1206
        %v1215 = vadd.f32 %v1119, %v1207
        %v1216 = vadd.f32 %v1120, %v1208
        %v1217 = vadd.f32 %v1121, %v1209
        %v1218 = vadd.f32 %v1122, %v1210
        %v1219 = vadd.f32 %v1123, %v1211
        %v1220 = vadd.f32 %v1124, %v1212
        %v1221 = vmul.f32 %v1085, 0.5
        %v1222 = vmul.f32 %v1086, 0.5
        %v1223 = vmul.f32 %v1087, 0.5
        %v1224 = vmul.f32 %v1088, 0.5
        %v1225 = vmul.f32 %v1089, 0.5
        %v1226 = vmul.f32 %v1090, 0.5
        %v1227 = vmul.f32 %v1091, 0.5
        %v1228 = vmul.f32 %v1092, 0.5
        %v1229 = vfloor.f32 %v1221
        %v1230 = vfloor.f32 %v1222
        %v1231 = vfloor.f32 %v1223
        %v1232 = vfloor.f32 %v1224
        %v1233 = vfloor.f32 %v1225
        %v1234 = vfloor.f32 %v1226
        %v1235 = vfloor.f32 %v1227
        %v1236 = vfloor.f32 %v1228
        %v1237 = vsub.f32 %v1221, %v1229
        %v1238 = vsub.f32 %v1222, %v1230
        %v1239 = vsub.f32 %v1223, %v1231
        %v1240 = vsub.f32 %v1224, %v1232
        %v1241 = vsub.f32 %v1225, %v1233
        %v1242 = vsub.f32 %v1226, %v1234
        %v1243 = vsub.f32 %v1227, %v1235
        %v1244 = vsub.f32 %v1228, %v1236
        %vm1245 = vcmp.gt.f32.partialorder %v1237, 0.25
        %vm1246 = vcmp.gt.f32.partialorder %v1238, 0.25
        %vm1247 = vcmp.gt.f32.partialorder %v1239, 0.25
        %vm1248 = vcmp.gt.f32.partialorder %v1240, 0.25
        %vm1249 = vcmp.gt.f32.partialorder %v1241, 0.25
        %vm1250 = vcmp.gt.f32.partialorder %v1242, 0.25
        %vm1251 = vcmp.gt.f32.partialorder %v1243, 0.25
        %vm1252 = vcmp.gt.f32.partialorder %v1244, 0.25
        %v1253 = vsub.f32 0.0, %v1213
        %v1254 = vsub.f32 0.0, %v1214
        %v1255 = vsub.f32 0.0, %v1215
        %v1256 = vsub.f32 0.0, %v1216
        %v1257 = vsub.f32 0.0, %v1217
        %v1258 = vsub.f32 0.0, %v1218
        %v1259 = vsub.f32 0.0, %v1219
        %v1260 = vsub.f32 0.0, %v1220
        %v1261 = vsel %vm1245, %v1253, %v1213
        %v1262 = vsel %vm1246, %v1254, %v1214
        %v1263 = vsel %vm1247, %v1255, %v1215
        %v1264 = vsel %vm1248, %v1256, %v1216
        %v1265 = vsel %vm1249, %v1257, %v1217
        %v1266 = vsel %vm1250, %v1258, %v1218
        %v1267 = vsel %vm1251, %v1259, %v1219
        %v1268 = vsel %vm1252, %v1260, %v1220
        %v1269 = vmul.f32 %v1061, %v1261
        %v1270 = vmul.f32 %v1062, %v1262
        %v1271 = vmul.f32 %v1063, %v1263
        %v1272 = vmul.f32 %v1064, %v1264
        %v1273 = vmul.f32 %v1065, %v1265
        %v1274 = vmul.f32 %v1066, %v1266
        %v1275 = vmul.f32 %v1067, %v1267
        %v1276 = vmul.f32 %v1068, %v1268
        %1277 = vst [vmem:[%s164] sm:$0xff] %v1269
        %1278 = vst [vmem:[%s164 + $0x8] sm:$0xff] %v1270
        %1279 = vst [vmem:[%s164 + $0x10] sm:$0xff] %v1271
        %1280 = vst [vmem:[%s164 + $0x18] sm:$0xff] %v1272
        %1281 = vst [vmem:[%s164 + $0x20] sm:$0xff] %v1273
        %1282 = vst [vmem:[%s164 + $0x28] sm:$0xff] %v1274
        %1283 = vst [vmem:[%s164 + $0x30] sm:$0xff] %v1275
        %1284 = vst [vmem:[%s164 + $0x38] sm:$0xff] %v1276
        %s1285 = sand.u32 %s93, 1
        %s1286 = scalar_lea.sflag [#allocation3], %s1285
        %s1287 = sand.u32 %s93, 1
        %s1288 = smul.addr %s1287, 64
        %s1289 = scalar_lea.vmem [#allocation2], %s1288
        // Predicated region
        $region33: #{tpu_custom_call.1} parent=31 // pred_check
          %p1290 = pneg %p103
        $region34: #{tpu_custom_call.1} parent=31 // pred_check_branch
          %1292 = sbr.rel (%p1290) target = $region36
        $region35: #{tpu_custom_call.1} parent=31 // pred_region
          %s1293 = smul.u32 8, %s17
          %1295 = vsyncadd %s1286, 0
          %s1296 = smul.addr %s1293, 8
          %s1297 = scalar_lea.hbm %s3, %s1296
          %s1298 = sshll.u32 %s1289, 4
          %s1299 = int_to_ptr.vmem [resolvable:$true] %s1298
          %s1300 = sshll.u32 %s1297, 4
          %s1301 = int_to_ptr.hbm [resolvable:$true] %s1300
          %1306 = dma.vmem_to_hbm [thread:$0]  %s1299, 1024, %s1301, %s1286, 128, 128, 8
        $region36: #{tpu_custom_call.1} parent=31 // pred_fallthru
          _
      $region32: #{tpu_custom_call.1} parent=5 // pred_fallthru
        _
      %p1307 = scmp.le.s32.totalorder 2, %s12
      // Predicated region
      $region37: #{tpu_custom_call.1} parent=5 // pred_check
        %p1308 = pneg %p1307
      $region38: #{tpu_custom_call.1} parent=5 // pred_check_branch
        %1310 = sbr.rel (%p1308) target = $region40
      $region39: #{tpu_custom_call.1} parent=5 // pred_region
        %s1311 = ssub.s32 %s12, 2
        // Predicated region
        $region41: #{tpu_custom_call.1} parent=39 // pred_check
          %p1312 = pneg %p109
        $region42: #{tpu_custom_call.1} parent=39 // pred_check_branch
          %1314 = sbr.rel (%p1312) target = $region44
        $region43: #{tpu_custom_call.1} parent=39 // pred_region
          %s1315 = sand.u32 %s94, 1
          %s1316 = scalar_lea.sflag [#allocation3], %s1315
          %s1317 = sand.u32 %s94, 1
          %s1318 = smul.addr %s1317, 64
          %s1319 = scalar_lea.vmem [#allocation2], %s1318
          %1321 = dma.done %s1316, 1024
        $region44: #{tpu_custom_call.1} parent=39 // pred_fallthru
          _
      $region40: #{tpu_custom_call.1} parent=5 // pred_fallthru
        _
    $region6: #{tpu_custom_call.1} parent=1 // loop_footer
      %s16 = sadd.s32 1, %s12
    $region7: #{tpu_custom_call.1} parent=1 // loop_footer_branch
      %11 = sbr.rel target = $region3
    $region8: #{tpu_custom_call.1} parent=1 // loop_exit
      _
    %1322 = vsyncpa [#allocation3], 1
    %s1323 = scalar_lea.sflag [#allocation3], 1
    %1324 = vsyncpa %s1323, 1

</llo_original>
